<compile_context>
chip_gen: v5e
topology: v5e:2x2
jax: 0.10.0
libtpu: 0.0.40
codegen_flags: <defaults>
</compile_context>

<pallas_src>
import functools

import numpy as np
import jax
import jax.numpy as jnp
from jax.experimental import pallas as pl
from jax.experimental.pallas import tpu as pltpu

_VMEM_LIMIT = 32 * 1024 * 1024  # explicit scoped-VMEM limit (v5e default is only 16 MiB)


# ----------------------------- Pallas kernels -------------------------------

def _up_phase_kernel(xf_ref, w_ref, mask_ref, o_ref, *, h, w, wp, eps):
    """Fused ConvTranspose2d(k=4,s=2,p=1,bias=False) + InstanceNorm2d + ReLU.

    xf_ref  : (1, Cin, FL)      zero-padded input, spatial flattened, row stride wp
    w_ref   : (4, Cout, 4*Cin)  per-output-parity packed (flipped) weights
    mask_ref: (1, L)            1.0 for valid columns (ix < w), 0.0 for junk
    o_ref   : (1, 4, Cout, L)   phase-major output, L = h*wp (spatial on lanes)
    """
    L = h * wp
    ys = []
    for ph in range(4):                     # 4 output parities, statically unrolled
        ry, rx = divmod(ph, 2)
        taps = [xf_ref[0, :, (ry + m) * wp + rx + n:(ry + m) * wp + rx + n + L]
                for m in (0, 1) for n in (0, 1)]        # 4 x (Cin, L) shifted views
        xph = jnp.concatenate(taps, axis=0)             # (4*Cin, L)
        ys.append(jnp.dot(w_ref[ph], xph, preferred_element_type=jnp.float32))
    y = jnp.stack(ys, axis=0)                           # (4, Cout, L) f32
    # InstanceNorm2d (affine=False, eps): stats over all 4*h*w valid spatial positions
    mask = mask_ref[...]                                # (1, L)
    cnt = 4.0 * h * w
    s = jnp.sum(jnp.sum(y * mask, axis=2, keepdims=True), axis=0, keepdims=True)
    mean = s / cnt                                      # (1, Cout, 1)
    d = (y - mean) * mask
    s2 = jnp.sum(jnp.sum(d * d, axis=2, keepdims=True), axis=0, keepdims=True)
    inv = jax.lax.rsqrt(s2 / cnt + eps)
    o_ref[0] = jnp.maximum((y - mean) * inv, 0.0).astype(o_ref.dtype)   # ReLU
    # TODO(synk): Dropout(0.5) on ups[0] is eval-mode identity (no masking applied).


def _final_phase_kernel(xf_ref, w_ref, b_ref, o_ref, *, h, wp, apply_sigmoid):
    """ConvTranspose2d(k=4,s=2,p=1) with bias, optional fused Sigmoid (phase form)."""
    L = h * wp
    b = b_ref[...].astype(jnp.float32)                  # (Cout, 1)
    for ph in range(4):
        ry, rx = divmod(ph, 2)
        taps = [xf_ref[0, :, (ry + m) * wp + rx + n:(ry + m) * wp + rx + n + L]
                for m in (0, 1) for n in (0, 1)]
        xph = jnp.concatenate(taps, axis=0)             # (4*Cin, L)
        y = jnp.dot(w_ref[ph], xph, preferred_element_type=jnp.float32) + b
        if apply_sigmoid:
            y = jax.nn.sigmoid(y)
        o_ref[0, ph] = y.astype(o_ref.dtype)


def _convT_s1_kernel(xf_ref, w_ref, b_ref, o_ref, *, oh, wp, k, apply_sigmoid):
    """Generic stride-1 ConvTranspose2d (flat-slab form) with bias / optional Sigmoid.

    xf_ref: (1, Cin, FL), w_ref: (K, Cout, K*Cin), b_ref: (Cout, 1), o_ref: (1, Cout, L).
    """
    L = oh * wp
    cout = o_ref.shape[1]
    acc = jnp.zeros((cout, L), jnp.float32)
    for kh in range(k):                                 # accumulate one kernel row at a time
        base = kh * wp
        taps = [xf_ref[0, :, base + kw:base + kw + L] for kw in range(k)]
        xrow = jnp.concatenate(taps, axis=0)            # (K*Cin, L)
        acc = acc + jnp.dot(w_ref[kh], xrow, preferred_element_type=jnp.float32)
    acc = acc + b_ref[...].astype(jnp.float32)
    if apply_sigmoid:
        acc = jax.nn.sigmoid(acc)
    o_ref[0] = acc.astype(o_ref.dtype)


# ------------------------------ weight packing --------------------------------

def _phase_weights(w_t):
    """PyTorch ConvTranspose2d weight (Cin,Cout,4,4) -> (4, Cout, 4*Cin) per-parity weights."""
    wflip = jnp.transpose(w_t[:, :, ::-1, ::-1], (2, 3, 0, 1))      # (K,K,Cin,Cout)
    phases = []
    for ry in range(2):
        for rx in range(2):
            taps = [wflip[ry + 2 * m, rx + 2 * n] for m in (0, 1) for n in (0, 1)]
            phases.append(jnp.concatenate(taps, axis=0).T)          # (Cout, 4*Cin)
    return jnp.stack(phases, axis=0)                                # (4, Cout, 4*Cin)


def _rowwise_weights(w_t):
    """(Cin,Cout,K,K) -> (K, Cout, K*Cin) flipped weights, one matmul per kernel row."""
    k = w_t.shape[2]
    wflip = jnp.transpose(w_t[:, :, ::-1, ::-1], (2, 3, 0, 1))      # (K,K,Cin,Cout)
    rows = [jnp.concatenate([wflip[kh, kw] for kw in range(k)], axis=0).T
            for kh in range(k)]                                     # (Cout, K*Cin)
    return jnp.stack(rows, axis=0)


# ------------------------------ JAX-side glue --------------------------------

def _compiler_params():
    return pltpu.CompilerParams(dimension_semantics=("parallel",),
                                vmem_limit_bytes=_VMEM_LIMIT)


def _deinterleave(out, n, cout, h, w, wp):
    """(N, 4, Cout, h*wp) phase-major -> NCHW (N, Cout, 2h, 2w), stripping junk columns."""
    y = out.reshape(n, 2, 2, cout, h, wp)[..., :w]
    return jnp.transpose(y, (0, 3, 4, 1, 5, 2)).reshape(n, cout, 2 * h, 2 * w)


def unet_up_pallas(x, w_t, *, dtype=jnp.bfloat16, eps=1e-5):
    """UNetUp conv stage: ConvT(k=4,s=2,p=1,no bias) + InstanceNorm + ReLU. NCHW in/out."""
    n, cin, h, w = x.shape
    assert w_t.shape[0] == cin and w_t.shape[2] == 4
    cout = w_t.shape[1]
    wp, L, fl = w + 2, h * (w + 2), (h + 3) * (w + 2)
    # pad by 1 (conv-transpose halo) + 1 extra row so all flat tap slices stay in bounds
    xf = jnp.pad(x, ((0, 0), (0, 0), (1, 2), (1, 1))).reshape(n, cin, fl).astype(dtype)
    wph = _phase_weights(w_t).astype(dtype)
    mask = jnp.tile((jnp.arange(wp) < w).astype(jnp.float32), h).reshape(1, L)
    kern = functools.partial(_up_phase_kernel, h=h, w=w, wp=wp, eps=eps)
    out = pl.pallas_call(
        kern,
        out_shape=jax.ShapeDtypeStruct((n, 4, cout, L), dtype),
        grid=(n,),
        in_specs=[
            pl.BlockSpec((1, cin, fl), lambda b: (b, 0, 0)),
            pl.BlockSpec((4, cout, 4 * cin), lambda b: (0, 0, 0)),
            pl.BlockSpec((1, L), lambda b: (0, 0)),
        ],
        out_specs=pl.BlockSpec((1, 4, cout, L), lambda b: (b, 0, 0, 0)),
        compiler_params=_compiler_params(),
    )(xf, wph, mask)
    return _deinterleave(out, n, cout, h, w, wp)


def _convT_phase_s2(x, w_t, bias, apply_sigmoid, *, dtype, out_dtype):
    """Final ConvTranspose2d(k=4,s=2,p=1) with bias, optional Sigmoid. NCHW in/out."""
    n, cin, h, w = x.shape
    cout = w_t.shape[1]
    wp, L, fl = w + 2, h * (w + 2), (h + 3) * (w + 2)
    xf = jnp.pad(x, ((0, 0), (0, 0), (1, 2), (1, 1))).reshape(n, cin, fl).astype(dtype)
    wph = _phase_weights(w_t).astype(dtype)
    b2 = bias.reshape(cout, 1).astype(jnp.float32)
    kern = functools.partial(_final_phase_kernel, h=h, wp=wp, apply_sigmoid=apply_sigmoid)
    out = pl.pallas_call(
        kern,
        out_shape=jax.ShapeDtypeStruct((n, 4, cout, L), out_dtype),
        grid=(n,),
        in_specs=[
            pl.BlockSpec((1, cin, fl), lambda b: (b, 0, 0)),
            pl.BlockSpec((4, cout, 4 * cin), lambda b: (0, 0, 0)),
            pl.BlockSpec((cout, 1), lambda b: (0, 0)),
        ],
        out_specs=pl.BlockSpec((1, 4, cout, L), lambda b: (b, 0, 0, 0)),
        compiler_params=_compiler_params(),
    )(xf, wph, b2)
    return _deinterleave(out, n, cout, h, w, wp)


def _convT_generic(x, w_t, bias, stride, padding, apply_sigmoid, *, dtype, out_dtype):
    """Generic ConvTranspose2d (stride-1 flat kernel; stride>1 via zero dilation in XLA).

    Used for the kernel_size>=10 branch of GoodDecoder.final and any non-(k=4,s=2) conv.
    """
    n, cin, h, w = x.shape
    cout, k = w_t.shape[1], w_t.shape[2]
    if stride > 1:
        # TODO(synk): rare fallback; zero-dilation re-introduces zero taps for this path.
        hd, wd = (h - 1) * stride + 1, (w - 1) * stride + 1
        x = jnp.zeros((n, cin, hd, wd), x.dtype).at[:, :, ::stride, ::stride].set(x)
        h, w = hd, wd
    pp = k - 1 - padding
    oh, ow = h + k - 1 - 2 * padding, w + k - 1 - 2 * padding
    wp = w + 2 * pp
    L, fl = oh * wp, (h + 2 * pp + 1) * wp
    xf = jnp.pad(x, ((0, 0), (0, 0), (pp, pp + 1), (pp, pp))).reshape(n, cin, fl).astype(dtype)
    wr = _rowwise_weights(w_t).astype(dtype)
    b2 = bias.reshape(cout, 1).astype(jnp.float32)
    kern = functools.partial(_convT_s1_kernel, oh=oh, wp=wp, k=k,
                             apply_sigmoid=apply_sigmoid)
    out = pl.pallas_call(
        kern,
        out_shape=jax.ShapeDtypeStruct((n, cout, L), out_dtype),
        grid=(n,),
        in_specs=[
            pl.BlockSpec((1, cin, fl), lambda b: (b, 0, 0)),
            pl.BlockSpec((k, cout, k * cin), lambda b: (0, 0, 0)),
            pl.BlockSpec((cout, 1), lambda b: (0, 0)),
        ],
        out_specs=pl.BlockSpec((1, cout, L), lambda b: (b, 0, 0)),
        compiler_params=_compiler_params(),
    )(xf, wr, b2)
    return out.reshape(n, cout, oh, wp)[..., :ow]


def convT_final_pallas(x, w_t, bias, stride, padding, apply_sigmoid, *, dtype, out_dtype):
    if w_t.shape[2] == 4 and stride == 2 and padding == 1:
        return _convT_phase_s2(x, w_t, bias, apply_sigmoid, dtype=dtype, out_dtype=out_dtype)
    return _convT_generic(x, w_t, bias, stride, padding, apply_sigmoid,
                          dtype=dtype, out_dtype=out_dtype)


# ----------------------------- Parameter init --------------------------------

def _init_convT_w(key, cin, cout, k):
    bound = 1.0 / np.sqrt(cin * k * k)
    return jax.random.uniform(key, (cin, cout, k, k), jnp.float32, -bound, bound)


def _init_bias(key, cout, cin, k):
    bound = 1.0 / np.sqrt(cin * k * k)
    return jax.random.uniform(key, (cout,), jnp.float32, -bound, bound)


# ------------------------------ GoodDecoder ----------------------------------

class GoodDecoderPallas:
    """Mirrors GoodDecoder.__init__/forward; convs run in Pallas TPU kernels."""

    def __init__(self, key, out_channels=1, out_dim=64, lowest_dim=4, filters=32):
        self.out_channels = out_channels
        self._key, self._cnt = key, 0

        def nk():
            self._cnt += 1
            return jax.random.fold_in(self._key, self._cnt)

        resize_factor = int(np.floor(np.log2(out_dim / lowest_dim)))
        filters = int(filters * 2 ** (resize_factor - 2))
        cur_dim = int(lowest_dim)

        self.ups = [{"w": _init_convT_w(nk(), filters, filters, 4), "dropout": 0.5}]
        cur_dim = int(cur_dim * 2)
        for _layer_idx in reversed(range(resize_factor)):
            self.ups.append({"w": _init_convT_w(nk(), 2 * filters, int(filters / 2), 4),
                             "dropout": 0.0})
            filters = int(filters / 2)
            cur_dim = int(cur_dim * 2)

        filters = 8 * filters
        cur_dim = int(cur_dim / 4)
        kernel_size = out_dim - (cur_dim - 1) * 2 + 2
        self.final = []
        if kernel_size < 10:
            self.final.append({"w": _init_convT_w(nk(), filters, out_channels, kernel_size),
                               "b": _init_bias(nk(), out_channels, filters, kernel_size),
                               "stride": 2, "padding": 1})
        else:
            num_int_layers = filters - 2
            s_dim = cur_dim
            int_dim = cur_dim
            for l_idx in range(num_int_layers):
                int_dim = int((l_idx + 1) * (out_dim - s_dim) / num_int_layers) + s_dim
                kernel_size = int_dim - (cur_dim - 1) + 2
                self.final.append({"w": _init_convT_w(nk(), filters, filters - 1, kernel_size),
                                   "b": _init_bias(nk(), filters - 1, filters, kernel_size),
                                   "stride": 1, "padding": 1})
                filters = filters - 1
                cur_dim = int_dim
            kernel_size = out_dim - (int_dim - 1) + 2
            self.final.append({"w": _init_convT_w(nk(), filters, out_channels, kernel_size),
                               "b": _init_bias(nk(), out_channels, filters, kernel_size),
                               "stride": 1, "padding": 1})
        # nn.Sigmoid() is fused into the last final conv's Pallas kernel.

    def __call__(self, downs, dtype=jnp.bfloat16):
        downs = downs[::-1]
        u = downs[0]
        for idx in range(len(downs) - 1):
            y = unet_up_pallas(u, self.ups[idx]["w"], dtype=dtype)
            u = jnp.concatenate([y, downs[idx + 1].astype(y.dtype)], axis=1)  # UNetUp cat
        out = u
        nfin = len(self.final)
        for i, f in enumerate(self.final):
            last = (i == nfin - 1)
            out = convT_final_pallas(out, f["w"], f["b"], f["stride"], f["padding"],
                                     apply_sigmoid=last, dtype=dtype,
                                     out_dtype=(jnp.float32 if last else dtype))
        return out.astype(jnp.float32)


# --------------------------- Pure-JAX reference ------------------------------

def _ref_conv_transpose(x, w_t, bias, stride, padding):
    cin, cout, k, _ = w_t.shape
    w_conv = jnp.transpose(jnp.flip(w_t, axis=(2, 3)), (1, 0, 2, 3))  # (Cout,Cin,K,K)
    pp = k - 1 - padding
    y = jax.lax.conv_general_dilated(
        x, w_conv, window_strides=(1, 1), padding=[(pp, pp), (pp, pp)],
        lhs_dilation=(stride, stride),
        dimension_numbers=("NCHW", "OIHW", "NCHW"))
    if bias is not None:
        y = y + bias[None, :, None, None]
    return y


def _ref_instance_norm(x, eps=1e-5):
    mean = jnp.mean(x, axis=(2, 3), keepdims=True)
    var = jnp.mean((x - mean) ** 2, axis=(2, 3), keepdims=True)
    return (x - mean) * jax.lax.rsqrt(var + eps)


def _ref_forward(dec, downs):
    ds = downs[::-1]
    u = ds[0]
    for idx in range(len(ds) - 1):
        y = _ref_conv_transpose(u, dec.ups[idx]["w"], None, 2, 1)
        y = jnp.maximum(_ref_instance_norm(y), 0.0)
        u = jnp.concatenate([y, ds[idx + 1]], axis=1)
    out = u
    for f in dec.final:
        out = _ref_conv_transpose(out, f["w"], f["b"], f["stride"], f["padding"])
    return jax.nn.sigmoid(out)


# ---------------------------------- main -------------------------------------

if __name__ == "__main__":
    # Small config: GoodDecoder(out_channels=1, out_dim=16, lowest_dim=4, filters=8)
    # -> ups = [UNetUp(8,8,do=.5), UNetUp(16,4), UNetUp(8,2)],
    #    final = [ConvTranspose2d(16,1,k=4,p=1,s=2), Sigmoid]
    B = 2
    dec = GoodDecoderPallas(jax.random.PRNGKey(0),
                            out_channels=1, out_dim=16, lowest_dim=4, filters=8)
    kd0, kd1 = jax.random.split(jax.random.PRNGKey(0), 2)
    downs = [
        jax.random.normal(kd0, (B, 8, 8, 8), jnp.float32),   # skip feature (NCHW)
        jax.random.normal(kd1, (B, 8, 4, 4), jnp.float32),   # deepest feature (NCHW)
    ]
    ref = jax.block_until_ready(_ref_forward(dec, downs))

    # f32 mode: tight check of the restructured kernels.
    out32 = jax.block_until_ready(dec(downs, dtype=jnp.float32))
    assert out32.shape == (B, 1, 16, 16), out32.shape
    assert jnp.allclose(out32, ref, atol=2e-3, rtol=2e-3), \
        float(jnp.max(jnp.abs(out32 - ref)))

    # bf16 operands (default fast path), f32 accumulation: looser tolerance.
    outbf = jax.block_until_ready(dec(downs, dtype=jnp.bfloat16))
    assert outbf.shape == (B, 1, 16, 16), outbf.shape
    assert jnp.allclose(outbf, ref, atol=2e-2, rtol=2e-2), \
        float(jnp.max(jnp.abs(outbf - ref)))

    # Exercise the generic stride-1 fallback (used by GoodDecoder.final when
    # kernel_size >= 10) against the pure-JAX reference.
    kw_, kb_, kx_ = jax.random.split(jax.random.PRNGKey(1), 3)
    wg = _init_convT_w(kw_, 8, 4, 3)
    bg = _init_bias(kb_, 4, 8, 3)
    xg = jax.random.normal(kx_, (B, 8, 8, 8), jnp.float32)
    yg = jax.block_until_ready(
        _convT_generic(xg, wg, bg, stride=1, padding=1, apply_sigmoid=False,
                       dtype=jnp.float32, out_dtype=jnp.float32))
    rg = _ref_conv_transpose(xg, wg, bg, 1, 1)
    assert yg.shape == rg.shape, (yg.shape, rg.shape)
    assert jnp.allclose(yg, rg, atol=5e-3, rtol=5e-3), \
        float(jnp.max(jnp.abs(yg - rg)))

    print("KERNEL_OK")
</pallas_src>

<mosaic_0001>
module attributes {stable_mosaic.version = 11 : i64} {
  func.func @_up_phase_kernel(%arg0: i32, %arg1: memref<1x8x42xf32, #tpu.memory_space<vmem>>, %arg2: memref<4x8x32xf32, #tpu.memory_space<vmem>>, %arg3: memref<1x24xf32, #tpu.memory_space<vmem>>, %arg4: memref<1x4x8x24xf32, #tpu.memory_space<vmem>>) attributes {dimension_semantics = [#tpu.dimension_semantics<parallel>], iteration_bounds = array<i64: 2>, scalar_prefetch = 0 : i64, scratch_operands = 0 : i64, tpu.core_type = #tpu.core_type<tc>, window_params = [{transform_indices = @transform_0, window_bounds = array<i64: 1, 8, 42>}, {pipeline_mode = #tpu.pipeline_mode<synchronous>, transform_indices = @transform_1, window_bounds = array<i64: 4, 8, 32>}, {pipeline_mode = #tpu.pipeline_mode<synchronous>, transform_indices = @transform_2, window_bounds = array<i64: 1, 24>}, {transform_indices = @transform_3, window_bounds = array<i64: 1, 4, 8, 24>}]} {
    %c0 = arith.constant 0 : index
    %c0_0 = arith.constant 0 : index
    %c0_1 = arith.constant 0 : index
    %0 = vector.load %arg1[%c0, %c0_0, %c0_1] : memref<1x8x42xf32, #tpu.memory_space<vmem>>, vector<1x8x24xf32>
    %1 = vector.shape_cast %0 : vector<1x8x24xf32> to vector<8x24xf32>
    %c0_2 = arith.constant 0 : index
    %c0_3 = arith.constant 0 : index
    %c1 = arith.constant 1 : index
    %2 = vector.load %arg1[%c0_2, %c0_3, %c1] : memref<1x8x42xf32, #tpu.memory_space<vmem>>, vector<1x8x24xf32>
    %3 = vector.shape_cast %2 : vector<1x8x24xf32> to vector<8x24xf32>
    %c0_4 = arith.constant 0 : index
    %c0_5 = arith.constant 0 : index
    %c6 = arith.constant 6 : index
    %4 = vector.load %arg1[%c0_4, %c0_5, %c6] : memref<1x8x42xf32, #tpu.memory_space<vmem>>, vector<1x8x24xf32>
    %5 = vector.shape_cast %4 : vector<1x8x24xf32> to vector<8x24xf32>
    %c0_6 = arith.constant 0 : index
    %c0_7 = arith.constant 0 : index
    %c7 = arith.constant 7 : index
    %6 = vector.load %arg1[%c0_6, %c0_7, %c7] : memref<1x8x42xf32, #tpu.memory_space<vmem>>, vector<1x8x24xf32>
    %7 = vector.shape_cast %6 : vector<1x8x24xf32> to vector<8x24xf32>
    %8 = tpu.concatenate %1, %3, %5, %7 in 0 : vector<8x24xf32>, vector<8x24xf32>, vector<8x24xf32>, vector<8x24xf32> -> vector<32x24xf32>
    %c0_8 = arith.constant 0 : index
    %c0_9 = arith.constant 0 : index
    %c0_10 = arith.constant 0 : index
    %9 = vector.load %arg2[%c0_8, %c0_9, %c0_10] : memref<4x8x32xf32, #tpu.memory_space<vmem>>, vector<1x8x32xf32>
    %10 = vector.shape_cast %9 : vector<1x8x32xf32> to vector<8x32xf32>
    %cst = arith.constant dense<0.000000e+00> : vector<8x24xf32>
    %11 = tpu.matmul %10, %8, %cst {dimension_numbers = #tpu.dot_dimension_numbers<[1], [0], [0], [1], [0, 0, 1, 1], [], []>} : vector<8x32xf32>, vector<32x24xf32>, vector<8x24xf32> -> vector<8x24xf32>
    %c0_11 = arith.constant 0 : index
    %c0_12 = arith.constant 0 : index
    %c1_13 = arith.constant 1 : index
    %12 = vector.load %arg1[%c0_11, %c0_12, %c1_13] : memref<1x8x42xf32, #tpu.memory_space<vmem>>, vector<1x8x24xf32>
    %13 = vector.shape_cast %12 : vector<1x8x24xf32> to vector<8x24xf32>
    %c0_14 = arith.constant 0 : index
    %c0_15 = arith.constant 0 : index
    %c2 = arith.constant 2 : index
    %14 = vector.load %arg1[%c0_14, %c0_15, %c2] : memref<1x8x42xf32, #tpu.memory_space<vmem>>, vector<1x8x24xf32>
    %15 = vector.shape_cast %14 : vector<1x8x24xf32> to vector<8x24xf32>
    %c0_16 = arith.constant 0 : index
    %c0_17 = arith.constant 0 : index
    %c7_18 = arith.constant 7 : index
    %16 = vector.load %arg1[%c0_16, %c0_17, %c7_18] : memref<1x8x42xf32, #tpu.memory_space<vmem>>, vector<1x8x24xf32>
    %17 = vector.shape_cast %16 : vector<1x8x24xf32> to vector<8x24xf32>
    %c0_19 = arith.constant 0 : index
    %c0_20 = arith.constant 0 : index
    %c8 = arith.constant 8 : index
    %18 = vector.load %arg1[%c0_19, %c0_20, %c8] : memref<1x8x42xf32, #tpu.memory_space<vmem>>, vector<1x8x24xf32>
    %19 = vector.shape_cast %18 : vector<1x8x24xf32> to vector<8x24xf32>
    %20 = tpu.concatenate %13, %15, %17, %19 in 0 : vector<8x24xf32>, vector<8x24xf32>, vector<8x24xf32>, vector<8x24xf32> -> vector<32x24xf32>
    %c1_21 = arith.constant 1 : index
    %c0_22 = arith.constant 0 : index
    %c0_23 = arith.constant 0 : index
    %21 = vector.load %arg2[%c1_21, %c0_22, %c0_23] : memref<4x8x32xf32, #tpu.memory_space<vmem>>, vector<1x8x32xf32>
    %22 = vector.shape_cast %21 : vector<1x8x32xf32> to vector<8x32xf32>
    %cst_24 = arith.constant dense<0.000000e+00> : vector<8x24xf32>
    %23 = tpu.matmul %22, %20, %cst_24 {dimension_numbers = #tpu.dot_dimension_numbers<[1], [0], [0], [1], [0, 0, 1, 1], [], []>} : vector<8x32xf32>, vector<32x24xf32>, vector<8x24xf32> -> vector<8x24xf32>
    %c0_25 = arith.constant 0 : index
    %c0_26 = arith.constant 0 : index
    %c6_27 = arith.constant 6 : index
    %24 = vector.load %arg1[%c0_25, %c0_26, %c6_27] : memref<1x8x42xf32, #tpu.memory_space<vmem>>, vector<1x8x24xf32>
    %25 = vector.shape_cast %24 : vector<1x8x24xf32> to vector<8x24xf32>
    %c0_28 = arith.constant 0 : index
    %c0_29 = arith.constant 0 : index
    %c7_30 = arith.constant 7 : index
    %26 = vector.load %arg1[%c0_28, %c0_29, %c7_30] : memref<1x8x42xf32, #tpu.memory_space<vmem>>, vector<1x8x24xf32>
    %27 = vector.shape_cast %26 : vector<1x8x24xf32> to vector<8x24xf32>
    %c0_31 = arith.constant 0 : index
    %c0_32 = arith.constant 0 : index
    %c12 = arith.constant 12 : index
    %28 = vector.load %arg1[%c0_31, %c0_32, %c12] : memref<1x8x42xf32, #tpu.memory_space<vmem>>, vector<1x8x24xf32>
    %29 = vector.shape_cast %28 : vector<1x8x24xf32> to vector<8x24xf32>
    %c0_33 = arith.constant 0 : index
    %c0_34 = arith.constant 0 : index
    %c13 = arith.constant 13 : index
    %30 = vector.load %arg1[%c0_33, %c0_34, %c13] : memref<1x8x42xf32, #tpu.memory_space<vmem>>, vector<1x8x24xf32>
    %31 = vector.shape_cast %30 : vector<1x8x24xf32> to vector<8x24xf32>
    %32 = tpu.concatenate %25, %27, %29, %31 in 0 : vector<8x24xf32>, vector<8x24xf32>, vector<8x24xf32>, vector<8x24xf32> -> vector<32x24xf32>
    %c2_35 = arith.constant 2 : index
    %c0_36 = arith.constant 0 : index
    %c0_37 = arith.constant 0 : index
    %33 = vector.load %arg2[%c2_35, %c0_36, %c0_37] : memref<4x8x32xf32, #tpu.memory_space<vmem>>, vector<1x8x32xf32>
    %34 = vector.shape_cast %33 : vector<1x8x32xf32> to vector<8x32xf32>
    %cst_38 = arith.constant dense<0.000000e+00> : vector<8x24xf32>
    %35 = tpu.matmul %34, %32, %cst_38 {dimension_numbers = #tpu.dot_dimension_numbers<[1], [0], [0], [1], [0, 0, 1, 1], [], []>} : vector<8x32xf32>, vector<32x24xf32>, vector<8x24xf32> -> vector<8x24xf32>
    %c0_39 = arith.constant 0 : index
    %c0_40 = arith.constant 0 : index
    %c7_41 = arith.constant 7 : index
    %36 = vector.load %arg1[%c0_39, %c0_40, %c7_41] : memref<1x8x42xf32, #tpu.memory_space<vmem>>, vector<1x8x24xf32>
    %37 = vector.shape_cast %36 : vector<1x8x24xf32> to vector<8x24xf32>
    %c0_42 = arith.constant 0 : index
    %c0_43 = arith.constant 0 : index
    %c8_44 = arith.constant 8 : index
    %38 = vector.load %arg1[%c0_42, %c0_43, %c8_44] : memref<1x8x42xf32, #tpu.memory_space<vmem>>, vector<1x8x24xf32>
    %39 = vector.shape_cast %38 : vector<1x8x24xf32> to vector<8x24xf32>
    %c0_45 = arith.constant 0 : index
    %c0_46 = arith.constant 0 : index
    %c13_47 = arith.constant 13 : index
    %40 = vector.load %arg1[%c0_45, %c0_46, %c13_47] : memref<1x8x42xf32, #tpu.memory_space<vmem>>, vector<1x8x24xf32>
    %41 = vector.shape_cast %40 : vector<1x8x24xf32> to vector<8x24xf32>
    %c0_48 = arith.constant 0 : index
    %c0_49 = arith.constant 0 : index
    %c14 = arith.constant 14 : index
    %42 = vector.load %arg1[%c0_48, %c0_49, %c14] : memref<1x8x42xf32, #tpu.memory_space<vmem>>, vector<1x8x24xf32>
    %43 = vector.shape_cast %42 : vector<1x8x24xf32> to vector<8x24xf32>
    %44 = tpu.concatenate %37, %39, %41, %43 in 0 : vector<8x24xf32>, vector<8x24xf32>, vector<8x24xf32>, vector<8x24xf32> -> vector<32x24xf32>
    %c3 = arith.constant 3 : index
    %c0_50 = arith.constant 0 : index
    %c0_51 = arith.constant 0 : index
    %45 = vector.load %arg2[%c3, %c0_50, %c0_51] : memref<4x8x32xf32, #tpu.memory_space<vmem>>, vector<1x8x32xf32>
    %46 = vector.shape_cast %45 : vector<1x8x32xf32> to vector<8x32xf32>
    %cst_52 = arith.constant dense<0.000000e+00> : vector<8x24xf32>
    %47 = tpu.matmul %46, %44, %cst_52 {dimension_numbers = #tpu.dot_dimension_numbers<[1], [0], [0], [1], [0, 0, 1, 1], [], []>} : vector<8x32xf32>, vector<32x24xf32>, vector<8x24xf32> -> vector<8x24xf32>
    %48 = vector.shape_cast %11 : vector<8x24xf32> to vector<1x8x24xf32>
    %49 = vector.shape_cast %23 : vector<8x24xf32> to vector<1x8x24xf32>
    %50 = vector.shape_cast %35 : vector<8x24xf32> to vector<1x8x24xf32>
    %51 = vector.shape_cast %47 : vector<8x24xf32> to vector<1x8x24xf32>
    %52 = tpu.concatenate %48, %49, %50, %51 in 0 : vector<1x8x24xf32>, vector<1x8x24xf32>, vector<1x8x24xf32>, vector<1x8x24xf32> -> vector<4x8x24xf32>
    %c0_53 = arith.constant 0 : index
    %c0_54 = arith.constant 0 : index
    %53 = vector.load %arg3[%c0_53, %c0_54] : memref<1x24xf32, #tpu.memory_space<vmem>>, vector<1x24xf32>
    %54 = vector.shape_cast %53 : vector<1x24xf32> to vector<1x1x24xf32>
    %55 = vector.broadcast %54 : vector<1x1x24xf32> to vector<4x8x24xf32>
    %56 = arith.mulf %52, %55 : vector<4x8x24xf32>
    %cst_55 = arith.constant dense<0.000000e+00> : vector<4x8xf32>
    %57 = vector.multi_reduction <add>, %56, %cst_55 [2] : vector<4x8x24xf32> to vector<4x8xf32>
    %58 = vector.shape_cast %57 : vector<4x8xf32> to vector<4x8x1xf32>
    %cst_56 = arith.constant dense<0.000000e+00> : vector<8x1xf32>
    %59 = vector.multi_reduction <add>, %58, %cst_56 [0] : vector<4x8x1xf32> to vector<8x1xf32>
    %60 = vector.shape_cast %59 : vector<8x1xf32> to vector<1x8x1xf32>
    %cst_57 = arith.constant 6.400000e+01 : f32
    %61 = vector.broadcast %cst_57 : f32 to vector<1x8x1xf32>
    %62 = arith.divf %60, %61 : vector<1x8x1xf32>
    %63 = vector.broadcast %62 : vector<1x8x1xf32> to vector<4x8x24xf32>
    %64 = arith.subf %52, %63 : vector<4x8x24xf32>
    %65 = vector.shape_cast %53 : vector<1x24xf32> to vector<1x1x24xf32>
    %66 = vector.broadcast %65 : vector<1x1x24xf32> to vector<4x8x24xf32>
    %67 = arith.mulf %64, %66 : vector<4x8x24xf32>
    %68 = arith.mulf %67, %67 : vector<4x8x24xf32>
    %cst_58 = arith.constant dense<0.000000e+00> : vector<4x8xf32>
    %69 = vector.multi_reduction <add>, %68, %cst_58 [2] : vector<4x8x24xf32> to vector<4x8xf32>
    %70 = vector.shape_cast %69 : vector<4x8xf32> to vector<4x8x1xf32>
    %cst_59 = arith.constant dense<0.000000e+00> : vector<8x1xf32>
    %71 = vector.multi_reduction <add>, %70, %cst_59 [0] : vector<4x8x1xf32> to vector<8x1xf32>
    %72 = vector.shape_cast %71 : vector<8x1xf32> to vector<1x8x1xf32>
    %cst_60 = arith.constant 6.400000e+01 : f32
    %73 = vector.broadcast %cst_60 : f32 to vector<1x8x1xf32>
    %74 = arith.divf %72, %73 : vector<1x8x1xf32>
    %cst_61 = arith.constant 9.99999974E-6 : f32
    %75 = vector.broadcast %cst_61 : f32 to vector<1x8x1xf32>
    %76 = arith.addf %74, %75 : vector<1x8x1xf32>
    %77 = math.rsqrt %76 : vector<1x8x1xf32>
    %78 = vector.broadcast %62 : vector<1x8x1xf32> to vector<4x8x24xf32>
    %79 = arith.subf %52, %78 : vector<4x8x24xf32>
    %80 = vector.broadcast %77 : vector<1x8x1xf32> to vector<4x8x24xf32>
    %81 = arith.mulf %79, %80 : vector<4x8x24xf32>
    %cst_62 = arith.constant 0.000000e+00 : f32
    %82 = vector.broadcast %cst_62 : f32 to vector<4x8x24xf32>
    %83 = arith.maximumf %81, %82 : vector<4x8x24xf32>
    %c0_63 = arith.constant 0 : index
    %c0_64 = arith.constant 0 : index
    %c0_65 = arith.constant 0 : index
    %c0_66 = arith.constant 0 : index
    %84 = vector.load %arg4[%c0_63, %c0_64, %c0_65, %c0_66] : memref<1x4x8x24xf32, #tpu.memory_space<vmem>>, vector<1x4x8x24xf32>
    %85 = vector.shape_cast %84 : vector<1x4x8x24xf32> to vector<4x8x24xf32>
    %86 = vector.shape_cast %83 : vector<4x8x24xf32> to vector<1x4x8x24xf32>
    tpu.vector_store %arg4[%c0_63, %c0_64, %c0_65, %c0_66], %86 {strides = array<i32>} : memref<1x4x8x24xf32, #tpu.memory_space<vmem>>, vector<1x4x8x24xf32>,
    return
  }
  func.func @transform_0(%arg0: i32) -> (i32, i32, i32) {
    %c0_i32 = arith.constant 0 : i32
    %c0_i32_0 = arith.constant 0 : i32
    %c0_i32_1 = arith.constant 0 : i32
    return %arg0, %c0_i32, %c0_i32_0 : i32, i32, i32
  }
  func.func @transform_1(%arg0: i32) -> (i32, i32, i32) {
    %c0_i32 = arith.constant 0 : i32
    %c0_i32_0 = arith.constant 0 : i32
    %c0_i32_1 = arith.constant 0 : i32
    %c0_i32_2 = arith.constant 0 : i32
    return %c0_i32, %c0_i32_0, %c0_i32_1 : i32, i32, i32
  }
  func.func @transform_2(%arg0: i32) -> (i32, i32) {
    %c0_i32 = arith.constant 0 : i32
    %c0_i32_0 = arith.constant 0 : i32
    %c0_i32_1 = arith.constant 0 : i32
    return %c0_i32, %c0_i32_0 : i32, i32
  }
  func.func @transform_3(%arg0: i32) -> (i32, i32, i32, i32) {
    %c0_i32 = arith.constant 0 : i32
    %c0_i32_0 = arith.constant 0 : i32
    %c0_i32_1 = arith.constant 0 : i32
    %c0_i32_2 = arith.constant 0 : i32
    return %arg0, %c0_i32, %c0_i32_0, %c0_i32_1 : i32, i32, i32, i32
  }
}

</mosaic_0001>

<llo_original>
// kernel: tpu_custom_call.1
$region0: #{tpu_custom_call.1}
  #allocation0 [shape = 'u32[]', space=smem, size = 0x4, offset = 0x4, fixed_abs, tag = 'smem constant byte address 0x4 - core index']
  #allocation1 [shape = 'u32[72,128]{1,0:T(1,128)}', space=vmem, size = 0x9000, scoped, tag = 'internal scratch']
  %s0 = inlined_call_operand.hbm [shape: f32[2,8,42], index: 0, kind: input, shape index: {}]
  %s1 = inlined_call_operand.hbm [shape: f32[4,8,32], index: 1, kind: input, shape index: {}]
  %s2 = inlined_call_operand.vmem [shape: f32[1,24], index: 2, kind: input, shape index: {}]
  %s3 = inlined_call_operand.hbm [shape: f32[2,4,8,24], index: 3, kind: output, shape index: {}]
  %s4 = sld [smem:[#allocation0]]
  $region53: #{tpu_custom_call.1} parent=0
    _
  %s6 = ssub.s32 1, %s4
  %s7 = scalar_select 0, %s6, %s4
  $region1: #{tpu_custom_call.1} parent=0
    #allocation2 [shape = 'u8[8192]{0}', space=vmem, size = 0x2000, scoped, tag = 'input window, operand 0']
    #allocation3 [shape = 's32[2]{0}', space=sflag, size = 0x8, scoped, tag = 'scoped memory for tpu_custom_call.1']
    #allocation4 [shape = 's32[2]{0}', space=sflag, size = 0x8, scoped, tag = 'scoped memory for tpu_custom_call.1']
    #allocation5 [shape = 'u8[16384]{0}', space=vmem, size = 0x4000, scoped, tag = 'input window, operand 1, single buffered']
    #allocation6 [shape = 's32[1]{0}', space=sflag, size = 0x4, scoped, tag = 'scoped memory for tpu_custom_call.1']
    #allocation7 [shape = 'u8[32768]{0}', space=vmem, size = 0x8000, scoped, tag = 'output window, operand 0']
    %8 = vsyncpa [#allocation3], 0
    %s9 = scalar_lea.sflag [#allocation3], 1
    %10 = vsyncpa %s9, 0
    %11 = vsyncpa [#allocation6], 0
    %12 = vsyncpa [#allocation4], 0
    %s13 = scalar_lea.sflag [#allocation4], 1
    %14 = vsyncpa %s13, 0
    loop: start=0, step=1, limit=4
    $region2: #{tpu_custom_call.1} parent=1 // loop_pre_header
      _
    $region3: #{tpu_custom_call.1} parent=1 // loop_header
      %s16 = sphi 0, %s20
      %p17 = scmp.ge.s32.totalorder %s16, 4
      %s26 = sphi 0, %s28
      %s29 = sphi 0, %s26
      %s30 = sphi 0, %s29
      %s46 = sphi 0, %s30
      %s50 = sphi 0, %s50
      %s52 = sphi 0, %s50
      %s53 = sphi 0, %s52
      %s67 = sphi 0, %s53
      %s71 = sphi 0, %s71
      %s73 = sphi 0, %s71
      %s74 = sphi 0, %s73
      %s88 = sphi 0, %s74
      %s94 = sphi 0, %s96
      %s97 = sphi 0, %s94
      %s98 = sphi 0, %s97
      %s114 = sphi 0, %s98
    $region4: #{tpu_custom_call.1} parent=1 // loop_header_branch
      %19 = sbr.rel (%p17) target = $region8
    $region5: #{tpu_custom_call.1} parent=1 // loop_body
      %s21 = ssub.s32 %s16, 1
      %s22 = ssub.s32 %s16, 2
      %s23 = sadd.s32 %s16, 1
      %s24 = ssub.s32 %s16, %s23
      %p25 = scmp.eq.s32.totalorder %s24, 0
      %s27 = sadd.s32 %s26, 1
      %s28 = scalar_select %p25, %s26, %s27
      %p31 = pneg %p25
      %p32 = scmp.eq.s32.totalorder %s16, 1
      %p33 = por %p31, %p32
      %p34 = scmp.ne.s32.totalorder %s26, %s29
      %p35 = scmp.eq.s32.totalorder %s16, 0
      %p36 = por %p34, %p35
      %p37 = scmp.ne.s32.totalorder %s26, %s29
      %p38 = scmp.eq.s32.totalorder %s21, 1
      %p39 = por %p37, %p38
      %p40 = scmp.ne.s32.totalorder %s29, %s30
      %p41 = scmp.eq.s32.totalorder %s21, 0
      %p42 = por %p40, %p41
      %p43 = scmp.ne.s32.totalorder %s29, %s30
      %p44 = scmp.eq.s32.totalorder %s22, 1
      %p45 = por %p43, %p44
      %p47 = scmp.ne.s32.totalorder %s30, %s46
      %p48 = scmp.eq.s32.totalorder %s22, 0
      %p49 = por %p47, %p48
      %s51 = sadd.s32 %s50, 1
      %p54 = scmp.eq.s32.totalorder %s16, 1
      %p55 = scmp.ne.s32.totalorder %s50, %s52
      %p56 = scmp.eq.s32.totalorder %s16, 0
      %p57 = por %p55, %p56
      %p58 = scmp.ne.s32.totalorder %s50, %s52
      %p59 = scmp.eq.s32.totalorder %s21, 1
      %p60 = por %p58, %p59
      %p61 = scmp.ne.s32.totalorder %s52, %s53
      %p62 = scmp.eq.s32.totalorder %s21, 0
      %p63 = por %p61, %p62
      %p64 = scmp.ne.s32.totalorder %s52, %s53
      %p65 = scmp.eq.s32.totalorder %s22, 1
      %p66 = por %p64, %p65
      %p68 = scmp.ne.s32.totalorder %s53, %s67
      %p69 = scmp.eq.s32.totalorder %s22, 0
      %p70 = por %p68, %p69
      %s72 = sadd.s32 %s71, 1
      %p75 = scmp.eq.s32.totalorder %s16, 1
      %p76 = scmp.ne.s32.totalorder %s71, %s73
      %p77 = scmp.eq.s32.totalorder %s16, 0
      %p78 = por %p76, %p77
      %p79 = scmp.ne.s32.totalorder %s71, %s73
      %p80 = scmp.eq.s32.totalorder %s21, 1
      %p81 = por %p79, %p80
      %p82 = scmp.ne.s32.totalorder %s73, %s74
      %p83 = scmp.eq.s32.totalorder %s21, 0
      %p84 = por %p82, %p83
      %p85 = scmp.ne.s32.totalorder %s73, %s74
      %p86 = scmp.eq.s32.totalorder %s22, 1
      %p87 = por %p85, %p86
      %p89 = scmp.ne.s32.totalorder %s74, %s88
      %p90 = scmp.eq.s32.totalorder %s22, 0
      %p91 = por %p89, %p90
      %s92 = ssub.s32 %s16, %s23
      %p93 = scmp.eq.s32.totalorder %s92, 0
      %s95 = sadd.s32 %s94, 1
      %s96 = scalar_select %p93, %s94, %s95
      %p99 = pneg %p93
      %p100 = scmp.eq.s32.totalorder %s16, 1
      %p101 = por %p99, %p100
      %p102 = scmp.ne.s32.totalorder %s94, %s97
      %p103 = scmp.eq.s32.totalorder %s16, 0
      %p104 = por %p102, %p103
      %p105 = scmp.ne.s32.totalorder %s94, %s97
      %p106 = scmp.eq.s32.totalorder %s21, 1
      %p107 = por %p105, %p106
      %p108 = scmp.ne.s32.totalorder %s97, %s98
      %p109 = scmp.eq.s32.totalorder %s21, 0
      %p110 = por %p108, %p109
      %p111 = scmp.ne.s32.totalorder %s97, %s98
      %p112 = scmp.eq.s32.totalorder %s22, 1
      %p113 = por %p111, %p112
      %p115 = scmp.ne.s32.totalorder %s98, %s114
      %p116 = scmp.eq.s32.totalorder %s22, 0
      %p117 = por %p115, %p116
      %p118 = scmp.le.s32.totalorder 1, %s16
      %p119 = scmp.lt.s32.totalorder %s16, 3
      %p120 = pnand %p118, %p119
      %p121 = pneg %p120
      // Predicated region
      $region9: #{tpu_custom_call.1} parent=5 // pred_check
        _
      $region10: #{tpu_custom_call.1} parent=5 // pred_check_branch
        %123 = sbr.rel (%p120) target = $region12
      $region11: #{tpu_custom_call.1} parent=5 // pred_region
        %s124 = ssub.s32 %s16, 1
        // Predicated region
        $region13: #{tpu_custom_call.1} parent=11 // pred_check
          %p125 = pneg %p63
        $region14: #{tpu_custom_call.1} parent=11 // pred_check_branch
          %127 = sbr.rel (%p125) target = $region16
        $region15: #{tpu_custom_call.1} parent=11 // pred_region
          %129 = vsyncadd [#allocation6], 0
          %s130 = sshll.u32 %s1, 4
          %s131 = int_to_ptr.hbm [resolvable:$true] %s130
          %s132 = sshll.u32 [#allocation5], 4
          %s133 = int_to_ptr.vmem [resolvable:$true] %s132
          %138 = dma.hbm_to_vmem [thread:$0]  %s131, 512, %s133, [#allocation6], 128, 128, 8
        $region16: #{tpu_custom_call.1} parent=11 // pred_fallthru
          _
        // Predicated region
        $region17: #{tpu_custom_call.1} parent=11 // pred_check
          %p139 = pneg %p84
        $region18: #{tpu_custom_call.1} parent=11 // pred_check_branch
          %141 = sbr.rel (%p139) target = $region20
        $region19: #{tpu_custom_call.1} parent=11 // pred_region
          _
        $region20: #{tpu_custom_call.1} parent=11 // pred_fallthru
          _
      $region12: #{tpu_custom_call.1} parent=5 // pred_fallthru
        _
      %p142 = scmp.lt.s32.totalorder %s16, 2
      // Predicated region
      $region21: #{tpu_custom_call.1} parent=5 // pred_check
        %p143 = pneg %p142
      $region22: #{tpu_custom_call.1} parent=5 // pred_check_branch
        %145 = sbr.rel (%p143) target = $region24
      $region23: #{tpu_custom_call.1} parent=5 // pred_region
        // Predicated region
        $region25: #{tpu_custom_call.1} parent=23 // pred_check
          %p146 = pneg %p36
        $region26: #{tpu_custom_call.1} parent=23 // pred_check_branch
          %148 = sbr.rel (%p146) target = $region28
        $region27: #{tpu_custom_call.1} parent=23 // pred_region
          %s149 = sand.u32 %s26, 1
          %s150 = scalar_lea.sflag [#allocation3], %s149
          %s151 = sand.u32 %s26, 1
          %s152 = smul.addr %s151, 8
          %s153 = scalar_lea.vmem [#allocation2], %s152
          %155 = vsyncadd %s150, 0
          %s156 = smul.addr %s16, 8
          %s157 = scalar_lea.hbm %s0, %s156
          %s159 = sshll.u32 %s157, 4
          %s160 = int_to_ptr.hbm [resolvable:$true] %s159
          %s161 = sshll.u32 %s153, 4
          %s162 = int_to_ptr.vmem [resolvable:$true] %s161
          %164 = dma.hbm_to_vmem [thread:$0]  %s160, 128, %s162, %s150
        $region28: #{tpu_custom_call.1} parent=23 // pred_fallthru
          _
      $region24: #{tpu_custom_call.1} parent=5 // pred_fallthru
        _
      %p165 = scmp.le.s32.totalorder 1, %s16
      %p166 = scmp.lt.s32.totalorder %s16, 3
      %p167 = pnand %p165, %p166
      %p168 = pneg %p167
      // Predicated region
      $region29: #{tpu_custom_call.1} parent=5 // pred_check
        _
      $region30: #{tpu_custom_call.1} parent=5 // pred_check_branch
        %170 = sbr.rel (%p167) target = $region32
      $region31: #{tpu_custom_call.1} parent=5 // pred_region
        %s171 = ssub.s32 %s16, 1
        %s172 = sand.u32 %s29, 1
        %s173 = scalar_lea.sflag [#allocation3], %s172
        %s174 = sand.u32 %s29, 1
        %s175 = smul.addr %s174, 8
        %s176 = scalar_lea.vmem [#allocation2], %s175
        // Predicated region
        $region33: #{tpu_custom_call.1} parent=31 // pred_check
          %p177 = pneg %p42
        $region34: #{tpu_custom_call.1} parent=31 // pred_check_branch
          %179 = sbr.rel (%p177) target = $region36
        $region35: #{tpu_custom_call.1} parent=31 // pred_region
          %181 = dma.done %s173, 128
        $region36: #{tpu_custom_call.1} parent=31 // pred_fallthru
          _
        // Predicated region
        $region37: #{tpu_custom_call.1} parent=31 // pred_check
          %p182 = pneg %p63
        $region38: #{tpu_custom_call.1} parent=31 // pred_check_branch
          %184 = sbr.rel (%p182) target = $region40
        $region39: #{tpu_custom_call.1} parent=31 // pred_region
          %186 = dma.done [#allocation6], 512
        $region40: #{tpu_custom_call.1} parent=31 // pred_fallthru
          _
        %s187 = sand.u32 %s29, 1
        %s188 = scalar_lea.sflag [#allocation3], %s187
        %s189 = sand.u32 %s29, 1
        %s190 = smul.addr %s189, 8
        %s191 = scalar_lea.vmem [#allocation2], %s190
        %p192 = pneg %p42
        %p193 = pneg %p39
        %p194 = pneg %p63
        %p195 = pneg %p60
        %p196 = pneg %p84
        %p197 = pneg %p81
        %p198 = pneg %p110
        %p199 = pneg %p107
        %s200 = sand.u32 %s97, 1
        %s201 = scalar_lea.sflag [#allocation4], %s200
        %s202 = sand.u32 %s97, 1
        %s203 = smul.addr %s202, 32
        %s204 = scalar_lea.vmem [#allocation7], %s203
        %v205 = vld [vmem:[%s176] sm:$0xff]
        %207 = vrot.lane.b32.xlu0 %v205, 127
        %v208 = vpop.permute.xlu0 %207
        %210 = vrot.lane.b32.xlu0 %v205, 122
        %v211 = vpop.permute.xlu0 %210
        %213 = vrot.lane.b32.xlu0 %v205, 121
        %v214 = vpop.permute.xlu0 %213
        %v216 = vld [vmem:[#allocation5] sm:$0xff]
        %vm217 = vcmask 261120
        %v219 = vsel %vm217, %v216, 0
        %221 = vmatpush.msra.mxu0 0.0
        %222 = vmatpush.msra.mxu0 0.0
        %223 = vmatpush.msra.mxu0 0.0
        %224 = vmatpush.msra.mxu0 0.0
        %225 = vmatpush.msra.mxu0 0.0
        %226 = vmatpush.msra.mxu0 0.0
        %227 = vmatpush.msra.mxu0 0.0
        %228 = vmatpush.msra.mxu0 0.0
        %229 = vmatpush.msra.mxu0 0.0
        %230 = vmatpush.msra.mxu0 0.0
        %231 = vmatpush.msra.mxu0 0.0
        %232 = vmatpush.msra.mxu0 0.0
        %233 = vmatpush.msra.mxu0 %v214
        %234 = vmatpush.msra.mxu0 %v211
        %235 = vmatpush.msra.mxu0 %v208
        %236 = vmatpush.msra.mxu0 %v205
        %237 = vmatmul.f32.gmra.mxu0 %v219
        %v238 = vpop.f32.mrf.mxu0
        %v239 = vadd.f32 0.0, %v238
        %240 = vdwg.mxu0
        %s241 = scalar_lea.vmem [#allocation5], 8
        %v242 = vld [vmem:[%s241] sm:$0xff]
        %243 = vrot.lane.b32.xlu0 %v208, 127
        %v244 = vpop.permute.xlu0 %243
        %245 = vrot.lane.b32.xlu0 %v211, 127
        %v246 = vpop.permute.xlu0 %245
        %247 = vrot.lane.b32.xlu0 %v214, 127
        %v248 = vpop.permute.xlu0 %247
        %v253 = vsel %vm217, %v242, 0
        %255 = vmatpush.msra.mxu0 0.0
        %256 = vmatpush.msra.mxu0 0.0
        %257 = vmatpush.msra.mxu0 0.0
        %258 = vmatpush.msra.mxu0 0.0
        %259 = vmatpush.msra.mxu0 0.0
        %260 = vmatpush.msra.mxu0 0.0
        %261 = vmatpush.msra.mxu0 0.0
        %262 = vmatpush.msra.mxu0 0.0
        %263 = vmatpush.msra.mxu0 0.0
        %264 = vmatpush.msra.mxu0 0.0
        %265 = vmatpush.msra.mxu0 0.0
        %266 = vmatpush.msra.mxu0 0.0
        %267 = vmatpush.msra.mxu0 %v248
        %268 = vmatpush.msra.mxu0 %v246
        %269 = vmatpush.msra.mxu0 %v244
        %270 = vmatpush.msra.mxu0 %v208
        %271 = vmatmul.f32.gmra.mxu0 %v253
        %v272 = vpop.f32.mrf.mxu0
        %v273 = vadd.f32 0.0, %v272
        %274 = vdwg.mxu0
        %s275 = scalar_lea.vmem [#allocation5], 16
        %v276 = vld [vmem:[%s275] sm:$0xff]
        %277 = vrot.lane.b32.xlu0 %v208, 122
        %v278 = vpop.permute.xlu0 %277
        %279 = vrot.lane.b32.xlu0 %v211, 122
        %v280 = vpop.permute.xlu0 %279
        %281 = vrot.lane.b32.xlu0 %v214, 122
        %v282 = vpop.permute.xlu0 %281
        %v287 = vsel %vm217, %v276, 0
        %289 = vmatpush.msra.mxu0 0.0
        %290 = vmatpush.msra.mxu0 0.0
        %291 = vmatpush.msra.mxu0 0.0
        %292 = vmatpush.msra.mxu0 0.0
        %293 = vmatpush.msra.mxu0 0.0
        %294 = vmatpush.msra.mxu0 0.0
        %295 = vmatpush.msra.mxu0 0.0
        %296 = vmatpush.msra.mxu0 0.0
        %297 = vmatpush.msra.mxu0 0.0
        %298 = vmatpush.msra.mxu0 0.0
        %299 = vmatpush.msra.mxu0 0.0
        %300 = vmatpush.msra.mxu0 0.0
        %301 = vmatpush.msra.mxu0 %v282
        %302 = vmatpush.msra.mxu0 %v280
        %303 = vmatpush.msra.mxu0 %v278
        %304 = vmatpush.msra.mxu0 %v211
        %305 = vmatmul.f32.gmra.mxu0 %v287
        %v306 = vpop.f32.mrf.mxu0
        %v307 = vadd.f32 0.0, %v306
        %308 = vdwg.mxu0
        %s309 = scalar_lea.vmem [#allocation5], 24
        %v310 = vld [vmem:[%s309] sm:$0xff]
        %311 = vrot.lane.b32.xlu0 %v208, 121
        %v312 = vpop.permute.xlu0 %311
        %313 = vrot.lane.b32.xlu0 %v211, 121
        %v314 = vpop.permute.xlu0 %313
        %315 = vrot.lane.b32.xlu0 %v214, 121
        %v316 = vpop.permute.xlu0 %315
        %v321 = vsel %vm217, %v310, 0
        %323 = vmatpush.msra.mxu0 0.0
        %324 = vmatpush.msra.mxu0 0.0
        %325 = vmatpush.msra.mxu0 0.0
        %326 = vmatpush.msra.mxu0 0.0
        %327 = vmatpush.msra.mxu0 0.0
        %328 = vmatpush.msra.mxu0 0.0
        %329 = vmatpush.msra.mxu0 0.0
        %330 = vmatpush.msra.mxu0 0.0
        %331 = vmatpush.msra.mxu0 0.0
        %332 = vmatpush.msra.mxu0 0.0
        %333 = vmatpush.msra.mxu0 0.0
        %334 = vmatpush.msra.mxu0 0.0
        %335 = vmatpush.msra.mxu0 %v316
        %336 = vmatpush.msra.mxu0 %v314
        %337 = vmatpush.msra.mxu0 %v312
        %338 = vmatpush.msra.mxu0 %v214
        %339 = vmatmul.f32.gmra.mxu0 %v321
        %v340 = vpop.f32.mrf.mxu0
        %v341 = vadd.f32 0.0, %v340
        %342 = vdwg.mxu0
        %v343 = vld [vmem:[%s2] sm:$0x1]
        %v345 = vperm.slane %v343, 0
        %v347 = vmul.f32 %v239, %v345
        %v348 = vmul.f32 %v273, %v345
        %v349 = vmul.f32 %v307, %v345
        %v350 = vmul.f32 %v341, %v345
        %vm351 = vcmask 195584
        %v352 = vsel %vm351, %v347, 0.0
        %353 = vadd.xlane.f32.xlu0 %v352
        %v354 = vpop.xlane.xlu0 %353
        %v355 = vsel %vm351, %v348, 0.0
        %356 = vadd.xlane.f32.xlu0 %v355
        %v357 = vpop.xlane.xlu0 %356
        %v358 = vsel %vm351, %v349, 0.0
        %359 = vadd.xlane.f32.xlu0 %v358
        %v360 = vpop.xlane.xlu0 %359
        %v361 = vsel %vm351, %v350, 0.0
        %362 = vadd.xlane.f32.xlu0 %v361
        %v363 = vpop.xlane.xlu0 %362
        %v364 = vadd.f32 %v354, %v357
        %v365 = vadd.f32 %v364, %v360
        %v366 = vadd.f32 %v365, %v363
        %v367 = vrcp.pop 64.0
        %v368 = vmul.f32 64.0, %v367
        %v369 = vsub.f32 1.0, %v368
        %v370 = vmul.f32 %v367, %v369
        %v371 = vadd.f32 %v367, %v370
        %vm372 = vweird.f32 %v367
        %v373 = vsel %vm372, %v367, %v371
        %v374 = vmul.f32 %v366, %v373
        %v375 = vsub.f32 %v239, %v374
        %v376 = vsub.f32 %v273, %v374
        %v377 = vsub.f32 %v307, %v374
        %v378 = vsub.f32 %v341, %v374
        %v379 = vmul.f32 %v375, %v345
        %v380 = vmul.f32 %v376, %v345
        %v381 = vmul.f32 %v377, %v345
        %v382 = vmul.f32 %v378, %v345
        %v383 = vmul.f32 %v379, %v379
        %v384 = vmul.f32 %v380, %v380
        %v385 = vmul.f32 %v381, %v381
        %v386 = vmul.f32 %v382, %v382
        %v387 = vsel %vm351, %v383, 0.0
        %388 = vadd.xlane.f32.xlu0 %v387
        %v389 = vpop.xlane.xlu0 %388
        %v390 = vsel %vm351, %v384, 0.0
        %391 = vadd.xlane.f32.xlu0 %v390
        %v392 = vpop.xlane.xlu0 %391
        %v393 = vsel %vm351, %v385, 0.0
        %394 = vadd.xlane.f32.xlu0 %v393
        %v395 = vpop.xlane.xlu0 %394
        %v396 = vsel %vm351, %v386, 0.0
        %397 = vadd.xlane.f32.xlu0 %v396
        %v398 = vpop.xlane.xlu0 %397
        %v399 = vadd.f32 %v389, %v392
        %v400 = vadd.f32 %v399, %v395
        %v401 = vadd.f32 %v400, %v398
        %v402 = vmul.f32 %v401, %v373
        %v403 = vadd.f32 %v402, 1e-05
        %v404 = vrsqrt.pop %v403
        %v405 = vmul.f32 %v404, %v403
        %v406 = vmul.f32 %v405, %v404
        %v407 = vmul.f32 0.5, %v406
        %v408 = vsub.f32 1.5, %v407
        %v409 = vmul.f32 %v404, %v408
        %vm410 = vweird.f32 %v403
        %vm411 = vweird.f32 %v404
        %vm412 = vmor %vm410, %vm411
        %v413 = vsel %vm412, %v404, %v409
        %v414 = vmul.f32 %v375, %v413
        %v415 = vmul.f32 %v376, %v413
        %v416 = vmul.f32 %v377, %v413
        %v417 = vmul.f32 %v378, %v413
        %v418 = vmax.f32 %v414, 0.0
        %v419 = vmax.f32 %v415, 0.0
        %v420 = vmax.f32 %v416, 0.0
        %v421 = vmax.f32 %v417, 0.0
        %422 = vst.msk [vmem:[%s204] sm:$0xff] %vm351, %v418
        %423 = vst.msk [vmem:[%s204 + $0x8] sm:$0xff] %vm351, %v419
        %424 = vst.msk [vmem:[%s204 + $0x10] sm:$0xff] %vm351, %v420
        %425 = vst.msk [vmem:[%s204 + $0x18] sm:$0xff] %vm351, %v421
        %s426 = sand.u32 %s97, 1
        %s427 = scalar_lea.sflag [#allocation4], %s426
        %s428 = sand.u32 %s97, 1
        %s429 = smul.addr %s428, 32
        %s430 = scalar_lea.vmem [#allocation7], %s429
        // Predicated region
        $region41: #{tpu_custom_call.1} parent=31 // pred_check
          %p431 = pneg %p107
        $region42: #{tpu_custom_call.1} parent=31 // pred_check_branch
          %433 = sbr.rel (%p431) target = $region44
        $region43: #{tpu_custom_call.1} parent=31 // pred_region
          %435 = vsyncadd %s427, 0
          %s436 = smul.addr %s21, 4
          %s437 = smul.addr %s436, 8
          %s438 = scalar_lea.hbm %s3, %s437
          %s439 = sshll.u32 %s430, 4
          %s440 = int_to_ptr.vmem [resolvable:$true] %s439
          %s441 = sshll.u32 %s438, 4
          %s442 = int_to_ptr.hbm [resolvable:$true] %s441
          %447 = dma.vmem_to_hbm [thread:$0]  %s440, 512, %s442, %s427, 128, 128, 8
        $region44: #{tpu_custom_call.1} parent=31 // pred_fallthru
          _
      $region32: #{tpu_custom_call.1} parent=5 // pred_fallthru
        _
      %p448 = scmp.le.s32.totalorder 2, %s16
      // Predicated region
      $region45: #{tpu_custom_call.1} parent=5 // pred_check
        %p449 = pneg %p448
      $region46: #{tpu_custom_call.1} parent=5 // pred_check_branch
        %451 = sbr.rel (%p449) target = $region48
      $region47: #{tpu_custom_call.1} parent=5 // pred_region
        %s452 = ssub.s32 %s16, 2
        // Predicated region
        $region49: #{tpu_custom_call.1} parent=47 // pred_check
          %p453 = pneg %p113
        $region50: #{tpu_custom_call.1} parent=47 // pred_check_branch
          %455 = sbr.rel (%p453) target = $region52
        $region51: #{tpu_custom_call.1} parent=47 // pred_region
          %s456 = sand.u32 %s98, 1
          %s457 = scalar_lea.sflag [#allocation4], %s456
          %s458 = sand.u32 %s98, 1
          %s459 = smul.addr %s458, 32
          %s460 = scalar_lea.vmem [#allocation7], %s459
          %462 = dma.done %s457, 512
        $region52: #{tpu_custom_call.1} parent=47 // pred_fallthru
          _
      $region48: #{tpu_custom_call.1} parent=5 // pred_fallthru
        _
    $region6: #{tpu_custom_call.1} parent=1 // loop_footer
      %s20 = sadd.s32 1, %s16
    $region7: #{tpu_custom_call.1} parent=1 // loop_footer_branch
      %15 = sbr.rel target = $region3
    $region8: #{tpu_custom_call.1} parent=1 // loop_exit
      _
    %463 = vsyncpa [#allocation3], 1
    %s464 = scalar_lea.sflag [#allocation3], 1
    %465 = vsyncpa %s464, 1
    %466 = vsyncpa [#allocation6], 1
    %467 = vsyncpa [#allocation4], 1
    %s468 = scalar_lea.sflag [#allocation4], 1
    %469 = vsyncpa %s468, 1

</llo_original>
